<compile_context>
chip_gen: v6e
topology: v6e:2x2x1
jax: 0.10.0
libtpu: 0.0.40
codegen_flags: <defaults>
</compile_context>

<pallas_src>
import functools
import math

import jax
import jax.numpy as jnp
from jax import lax
from jax.experimental import pallas as pl
from jax.experimental.pallas import tpu as pltpu


# ---------------------------------------------------------------------------
# Parameter setup (plain JAX): sinusoidal PE table, same recipe as the module.
# Build it once in the model dtype so the hot path never re-casts it.
# ---------------------------------------------------------------------------
def make_positional_encoding_table(embedding_dim: int, max_len: int = 2048,
                                   dtype=jnp.float32) -> jnp.ndarray:
    """Deterministic sinusoidal PE table, shape (1, max_len, embedding_dim)."""
    assert embedding_dim % 2 == 0, "embedding_dim must be even (classic sinusoidal PE)"
    position = jnp.arange(max_len, dtype=jnp.float32)[:, None]                 # (L, 1)
    div_term = jnp.exp(
        jnp.arange(0, embedding_dim, 2, dtype=jnp.float32)
        * (-math.log(10000.0) / embedding_dim)
    )                                                                           # (D/2,)
    pe = jnp.zeros((max_len, embedding_dim), dtype=jnp.float32)
    pe = pe.at[:, 0::2].set(jnp.sin(position * div_term))
    pe = pe.at[:, 1::2].set(jnp.cos(position * div_term))
    return pe[None, :, :].astype(dtype)                                         # (1, L, D)


# ---------------------------------------------------------------------------
# Integer-hash helpers (portable fallback PRNG: plain 32-bit VPU ops only).
# ---------------------------------------------------------------------------
def _i32(pattern: int) -> jnp.int32:
    """32-bit literal -> int32 constant (two's-complement wrap for >= 2**31)."""
    pattern &= 0xFFFFFFFF
    if pattern >= 1 << 31:
        pattern -= 1 << 32
    return jnp.int32(pattern)


def _mix32(x):
    """'lowbias32' mixer: int32 math, logical shifts, wrap-around multiplies."""
    s16 = jnp.int32(16)
    s15 = jnp.int32(15)
    x = lax.shift_right_logical(x, s16) ^ x
    x = x * _i32(0x7FEB352D)
    x = lax.shift_right_logical(x, s15) ^ x
    x = x * _i32(0x846CA68B)
    x = lax.shift_right_logical(x, s16) ^ x
    return x


# ---------------------------------------------------------------------------
# Kernel: y = x + pe, then (optionally) inverted dropout.
# ---------------------------------------------------------------------------
def _pe_dropout_kernel(seed_ref, x_ref, pe_ref, o_ref, *,
                       p: float, training: bool, use_hw_prng: bool):
    # x_ref / o_ref: (tile_rows, 128)  -- batch dim squeezed by the BlockSpec.
    # pe_ref:        (tile_rows, 128)  -- same row tile, shared across batch.
    y = x_ref[...] + pe_ref[...]            # compute stays in the input dtype

    if (not training) or p <= 0.0:          # eval mode / p=0: identity dropout
        o_ref[...] = y.astype(o_ref.dtype)
        return

    if p >= 1.0:                            # matches nn.Dropout(p=1.0)
        o_ref[...] = jnp.zeros(y.shape, dtype=o_ref.dtype)
        return

    rows, lanes = y.shape
    # Unique stream per (row-tile, batch) grid cell so every block gets an
    # independent dropout mask.
    block_id = pl.program_id(0) * pl.num_programs(1) + pl.program_id(1)

    if use_hw_prng:
        # Hardware PRNG: mask generation stays off the VALU slots, keeping the
        # kernel at the HBM roofline on v6e/v7x.
        pltpu.prng_seed(seed_ref[0] + block_id)
        bits = pltpu.bitcast(pltpu.prng_random_bits((rows, lanes)), jnp.uint32)
        thr = jnp.uint32(min(int(round(p * (1 << 32))), (1 << 32) - 1))
        keep = bits >= thr                  # P(keep) = 1 - p
    else:
        # Portable counter-hash fallback (no TPU-only primitives).
        key = _mix32(seed_ref[0] + block_id * _i32(0x9E3779B9))
        r_idx = lax.broadcasted_iota(jnp.int32, (rows, lanes), 0)
        c_idx = lax.broadcasted_iota(jnp.int32, (rows, lanes), 1)
        bits = _mix32((r_idx * jnp.int32(lanes) + c_idx) ^ key)   # ~uniform int32
        thr = _i32(min(int(round(p * (1 << 32))), (1 << 32) - 1) - (1 << 31))
        keep = bits >= thr                  # P(keep) = 1 - p

    # where/scale in f32, single cast at the store (no bf16 scale bias).
    yf = y.astype(jnp.float32)
    scaled = jnp.where(keep, yf, jnp.float32(0.0)) * jnp.float32(1.0 / (1.0 - p))
    o_ref[...] = scaled.astype(o_ref.dtype)


# ---------------------------------------------------------------------------
# Wrapper: lane-dense layout, tiling, pallas_call.
# ---------------------------------------------------------------------------
def _pick_row_tile(n_rows: int, lanes: int, itemsize: int) -> int:
    """Largest sublane-aligned row tile targeting ~2 MiB per block (byte-based,
    dtype independent); ~6 resident buffers then stay <= ~12 MiB of VMEM."""
    sublane = max(8, 32 // max(itemsize, 1))            # 8 f32 / 16 bf16 / 32 int8
    target_block_bytes = 2 << 20                        # ~roofline plateau on v6e
    max_rows = max(sublane, target_block_bytes // (lanes * itemsize))
    if n_rows <= max_rows:
        return n_rows                                   # full extent is always legal
    return max(sublane, (max_rows // sublane) * sublane)


def positional_encoding_forward(
    x: jnp.ndarray,
    pe: jnp.ndarray,
    *,
    p: float = 0.1,
    training: bool = False,
    seed: int = 0,
    use_hw_prng: bool = True,
) -> jnp.ndarray:
    """Forward: x[B,S,D] + pe[:, :S, :], then dropout (identity in eval mode)."""
    B, S, D = x.shape
    assert pe.ndim == 3 and pe.shape[0] == 1 and pe.shape[2] == D
    assert S <= pe.shape[1], "sequence length exceeds max_len of the PE table"

    pe_slice = pe[0, :S, :]
    if pe_slice.dtype != x.dtype:           # no-op when the table was pre-cast
        pe_slice = pe_slice.astype(x.dtype)

    # Lane-dense view for every shape: flatten (S, D) and pad the tail to a
    # multiple of 128 so the output last dim is always a dense multiple of 128.
    LANES = 128
    flat = S * D
    padded = pl.cdiv(flat, LANES) * LANES
    rows = padded // LANES

    x_flat = x.reshape(B, flat)
    pe_flat = pe_slice.reshape(flat)
    if padded != flat:
        x_flat = jnp.pad(x_flat, ((0, 0), (0, padded - flat)))
        pe_flat = jnp.pad(pe_flat, ((0, padded - flat),))
    x2 = x_flat.reshape(B, rows, LANES)
    pe2 = pe_flat.reshape(rows, LANES)

    tr = _pick_row_tile(rows, LANES, x.dtype.itemsize)
    # Batch innermost: PE block index is constant across consecutive grid steps
    # -> Pallas skips the redundant PE DMA (fetched once per row tile, not B x).
    # Row-tile axis (usually the larger extent) first for the v7x megacore split.
    grid = (pl.cdiv(rows, tr), B)
    seed_arr = jnp.asarray([seed], dtype=jnp.int32)

    kernel = functools.partial(
        _pe_dropout_kernel, p=float(p), training=bool(training),
        use_hw_prng=bool(use_hw_prng))

    out = pl.pallas_call(
        kernel,
        out_shape=jax.ShapeDtypeStruct((B, rows, LANES), x.dtype),
        grid=grid,
        in_specs=[
            pl.BlockSpec(memory_space=pltpu.MemorySpace.SMEM),        # dropout seed
            pl.BlockSpec((None, tr, LANES), lambda r, b: (b, r, 0)),  # x (batch squeezed)
            pl.BlockSpec((tr, LANES), lambda r, b: (r, 0)),           # pe (batch-invariant)
        ],
        out_specs=pl.BlockSpec((None, tr, LANES), lambda r, b: (b, r, 0)),
        compiler_params=pltpu.CompilerParams(
            dimension_semantics=("parallel", "parallel"),   # megacore-friendly
            # 32 MiB: above the 16 MiB v5e default; at the safe ceiling for
            # v7x (64 MiB physical).  Do not raise past ~48 MiB for v7x.
            vmem_limit_bytes=32 << 20,
        ),
    )(seed_arr, x2, pe2)

    out = out.reshape(B, padded)
    if padded != flat:
        out = out[:, :flat]
    return out.reshape(B, S, D)


# ---------------------------------------------------------------------------
# Demo / self-check.
# ---------------------------------------------------------------------------
if __name__ == "__main__":
    B, S, D = 2, 8, 32
    MAX_LEN = 2048
    P = 0.1

    key = jax.random.PRNGKey(0)
    x = jax.random.normal(key, (B, S, D), dtype=jnp.float32)
    pe = make_positional_encoding_table(D, MAX_LEN, dtype=x.dtype)  # pre-cast once

    # Eval mode (dropout = identity): must match the reference exactly.
    out = jax.block_until_ready(positional_encoding_forward(x, pe, p=P, training=False))
    ref = x + pe[:, :S, :]
    assert out.shape == (B, S, D)
    assert jnp.allclose(out, ref, atol=1e-6), "eval-mode mismatch vs reference"

    # Non-lane-aligned shape exercises the padded (S*D % 128 != 0) path.
    x_odd = jax.random.normal(jax.random.PRNGKey(1), (B, 5, 20), dtype=jnp.float32)
    pe_odd = make_positional_encoding_table(20, 64, dtype=x_odd.dtype)
    out_odd = jax.block_until_ready(
        positional_encoding_forward(x_odd, pe_odd, p=P, training=False))
    assert jnp.allclose(out_odd, x_odd + pe_odd[:, :5, :], atol=1e-6), "padded path mismatch"

    # Training mode: every element is either dropped (0) or ref / (1 - p).
    # TODO(synk): dropout mask uses the TPU PRNG (or a counter-hash fallback),
    # not torch's RNG stream; the distributional semantics of nn.Dropout(p) hold.
    try:
        out_tr = jax.block_until_ready(
            positional_encoding_forward(x, pe, p=P, training=True, seed=123,
                                        use_hw_prng=True))
    except Exception:
        # Backend without the TPU PRNG primitives (e.g. interpret mode).
        out_tr = jax.block_until_ready(
            positional_encoding_forward(x, pe, p=P, training=True, seed=123,
                                        use_hw_prng=False))
    scaled = ref / (1.0 - P)
    dropped = jnp.abs(out_tr) < 1e-8
    kept_ok = jnp.abs(out_tr - scaled) < 1e-4
    assert bool(jnp.all(dropped | kept_ok)), "training-mode values inconsistent"
    assert int(jnp.sum(dropped)) < out_tr.size, "dropout mask degenerate (all dropped)"

    print("KERNEL_OK")
</pallas_src>

<mosaic_0001>
module attributes {stable_mosaic.version = 11 : i64} {
  func.func @_pe_dropout_kernel(%arg0: i32, %arg1: i32, %arg2: memref<1xi32, #tpu.memory_space<smem>>, %arg3: memref<1x2x128xf32, #tpu.memory_space<vmem>>, %arg4: memref<2x128xf32, #tpu.memory_space<vmem>>, %arg5: memref<1x2x128xf32, #tpu.memory_space<vmem>>) attributes {dimension_semantics = [#tpu.dimension_semantics<parallel>, #tpu.dimension_semantics<parallel>], iteration_bounds = array<i64: 1, 2>, scalar_prefetch = 0 : i64, scratch_operands = 0 : i64, tpu.core_type = #tpu.core_type<tc>, window_params = [{transform_indices = @transform_0, window_bounds = array<i64: 1>}, {transform_indices = @transform_1, window_bounds = array<i64: 1, 2, 128>}, {transform_indices = @transform_2, window_bounds = array<i64: 2, 128>}, {transform_indices = @transform_3, window_bounds = array<i64: 1, 2, 128>}]} {
    %c0 = arith.constant 0 : index
    %c0_0 = arith.constant 0 : index
    %c0_1 = arith.constant 0 : index
    %0 = vector.load %arg3[%c0, %c0_0, %c0_1] : memref<1x2x128xf32, #tpu.memory_space<vmem>>, vector<1x2x128xf32>
    %1 = vector.shape_cast %0 : vector<1x2x128xf32> to vector<2x128xf32>
    %c0_2 = arith.constant 0 : index
    %c0_3 = arith.constant 0 : index
    %2 = vector.load %arg4[%c0_2, %c0_3] : memref<2x128xf32, #tpu.memory_space<vmem>>, vector<2x128xf32>
    %3 = arith.addf %1, %2 : vector<2x128xf32>
    %c0_4 = arith.constant 0 : index
    %c0_5 = arith.constant 0 : index
    %c0_6 = arith.constant 0 : index
    %4 = vector.load %arg5[%c0_4, %c0_5, %c0_6] : memref<1x2x128xf32, #tpu.memory_space<vmem>>, vector<1x2x128xf32>
    %5 = vector.shape_cast %4 : vector<1x2x128xf32> to vector<2x128xf32>
    %6 = vector.shape_cast %3 : vector<2x128xf32> to vector<1x2x128xf32>
    tpu.vector_store %arg5[%c0_4, %c0_5, %c0_6], %6 {strides = array<i32>} : memref<1x2x128xf32, #tpu.memory_space<vmem>>, vector<1x2x128xf32>,
    return
  }
  func.func @transform_0(%arg0: i32, %arg1: i32) -> i32 {
    %c0_i32 = arith.constant 0 : i32
    %c0_i32_0 = arith.constant 0 : i32
    return %c0_i32 : i32
  }
  func.func @transform_1(%arg0: i32, %arg1: i32) -> (i32, i32, i32) {
    %c0_i32 = arith.constant 0 : i32
    %c0_i32_0 = arith.constant 0 : i32
    return %arg1, %arg0, %c0_i32 : i32, i32, i32
  }
  func.func @transform_2(%arg0: i32, %arg1: i32) -> (i32, i32) {
    %c0_i32 = arith.constant 0 : i32
    %c0_i32_0 = arith.constant 0 : i32
    return %arg0, %c0_i32 : i32, i32
  }
  func.func @transform_3(%arg0: i32, %arg1: i32) -> (i32, i32, i32) {
    %c0_i32 = arith.constant 0 : i32
    %c0_i32_0 = arith.constant 0 : i32
    return %arg1, %arg0, %c0_i32 : i32, i32, i32
  }
}

</mosaic_0001>

<llo_original>
// kernel: tpu_custom_call.1
$region0: #{tpu_custom_call.1}
  #allocation0 [shape = 'u32[]', space=smem, size = 0x4, offset = 0x4, fixed_abs, tag = 'smem constant byte address 0x4 - core index']
  #allocation1 [shape = 'u32[144,128]{1,0:T(1,128)}', space=vmem, size = 0x12000, scoped, tag = 'internal scratch']
  #allocation2 [shape = 's32[1]{0:T(128)S(6)}', space=smem, size = 0x200, scoped, tag = 'scoped memory for tpu_custom_call.1']
  %s0 = inlined_call_operand.<no memory space> [shape: s32[1], index: 0, kind: input, shape index: {}]
  %s1 = inlined_call_operand.hbm [shape: f32[2,2,128], index: 1, kind: input, shape index: {}]
  %s2 = inlined_call_operand.vmem [shape: f32[2,128], index: 2, kind: input, shape index: {}]
  %s3 = inlined_call_operand.hbm [shape: f32[2,2,128], index: 3, kind: output, shape index: {}]
  %s4 = sld [smem:[#allocation0]]
  $region49: #{tpu_custom_call.1} parent=0
    _
  %s6 = ssub.s32 1, %s4
  %s7 = scalar_select 0, %s6, %s4
  %8 = sst [smem:[#allocation2]] %s0
  $region1: #{tpu_custom_call.1} parent=0
    #allocation3 [shape = 'u8[2048]{0}', space=vmem, size = 0x800, scoped, tag = 'input window, operand 1']
    #allocation4 [shape = 's32[2]{0}', space=sflag, size = 0x8, scoped, tag = 'scoped memory for tpu_custom_call.1']
    #allocation5 [shape = 's32[2]{0}', space=sflag, size = 0x8, scoped, tag = 'scoped memory for tpu_custom_call.1']
    #allocation6 [shape = 'u8[2048]{0}', space=vmem, size = 0x800, scoped, tag = 'output window, operand 0']
    %9 = vsyncpa [#allocation4], 0
    %s10 = scalar_lea.sflag [#allocation4], 1
    %11 = vsyncpa %s10, 0
    %12 = vsyncpa [#allocation5], 0
    %s13 = scalar_lea.sflag [#allocation5], 1
    %14 = vsyncpa %s13, 0
    loop: start=0, step=1, limit=4
    $region2: #{tpu_custom_call.1} parent=1 // loop_pre_header
      _
    $region3: #{tpu_custom_call.1} parent=1 // loop_header
      %s16 = sphi 0, %s20
      %p17 = scmp.ge.s32.totalorder %s16, 4
      %s23 = sphi 0, %s35
      %s24 = sphi 0, %s31
      %s25 = sphi 0, %s23
      %s26 = sphi 0, %s24
      %s27 = sphi 0, %s25
      %s28 = sphi 0, %s26
      %s36 = sphi 0, %s36
      %s38 = sphi 0, %s36
      %s39 = sphi 0, %s38
      %s53 = sphi 0, %s39
      %s61 = sphi 0, %s63
      %s64 = sphi 0, %s61
      %s65 = sphi 0, %s64
      %s81 = sphi 0, %s65
      %s87 = sphi 0, %s89
      %s90 = sphi 0, %s87
      %s91 = sphi 0, %s90
      %s107 = sphi 0, %s91
      %s115 = sphi 0, %s117
      %s118 = sphi 0, %s115
      %s119 = sphi 0, %s118
      %s135 = sphi 0, %s119
    $region4: #{tpu_custom_call.1} parent=1 // loop_header_branch
      %19 = sbr.rel (%p17) target = $region8
    $region5: #{tpu_custom_call.1} parent=1 // loop_body
      %s21 = ssub.s32 %s16, 1
      %s22 = ssub.s32 %s16, 2
      %s29 = sadd.s32 1, %s24
      %p30 = scmp.ge.s32.totalorder %s29, 2
      %s31 = scalar_select %p30, 0, %s29
      %s32 = sadd.s32 1, %s23
      %s33 = scalar_select %p30, %s32, %s23
      %p34 = scmp.ge.s32.totalorder %s33, 1
      %s35 = scalar_select %p34, 0, %s33
      %s37 = sadd.s32 %s36, 1
      %p40 = scmp.eq.s32.totalorder %s16, 1
      %p41 = scmp.ne.s32.totalorder %s36, %s38
      %p42 = scmp.eq.s32.totalorder %s16, 0
      %p43 = por %p41, %p42
      %p44 = scmp.ne.s32.totalorder %s36, %s38
      %p45 = scmp.eq.s32.totalorder %s21, 1
      %p46 = por %p44, %p45
      %p47 = scmp.ne.s32.totalorder %s38, %s39
      %p48 = scmp.eq.s32.totalorder %s21, 0
      %p49 = por %p47, %p48
      %p50 = scmp.ne.s32.totalorder %s38, %s39
      %p51 = scmp.eq.s32.totalorder %s22, 1
      %p52 = por %p50, %p51
      %p54 = scmp.ne.s32.totalorder %s39, %s53
      %p55 = scmp.eq.s32.totalorder %s22, 0
      %p56 = por %p54, %p55
      %s57 = ssub.s32 %s24, %s31
      %s58 = ssub.s32 %s23, %s35
      %s59 = sor.u32 %s57, %s58
      %p60 = scmp.eq.s32.totalorder %s59, 0
      %s62 = sadd.s32 %s61, 1
      %s63 = scalar_select %p60, %s61, %s62
      %p66 = pneg %p60
      %p67 = scmp.eq.s32.totalorder %s16, 1
      %p68 = por %p66, %p67
      %p69 = scmp.ne.s32.totalorder %s61, %s64
      %p70 = scmp.eq.s32.totalorder %s16, 0
      %p71 = por %p69, %p70
      %p72 = scmp.ne.s32.totalorder %s61, %s64
      %p73 = scmp.eq.s32.totalorder %s21, 1
      %p74 = por %p72, %p73
      %p75 = scmp.ne.s32.totalorder %s64, %s65
      %p76 = scmp.eq.s32.totalorder %s21, 0
      %p77 = por %p75, %p76
      %p78 = scmp.ne.s32.totalorder %s64, %s65
      %p79 = scmp.eq.s32.totalorder %s22, 1
      %p80 = por %p78, %p79
      %p82 = scmp.ne.s32.totalorder %s65, %s81
      %p83 = scmp.eq.s32.totalorder %s22, 0
      %p84 = por %p82, %p83
      %s85 = ssub.s32 %s23, %s35
      %p86 = scmp.eq.s32.totalorder %s85, 0
      %s88 = sadd.s32 %s87, 1
      %s89 = scalar_select %p86, %s87, %s88
      %p92 = pneg %p86
      %p93 = scmp.eq.s32.totalorder %s16, 1
      %p94 = por %p92, %p93
      %p95 = scmp.ne.s32.totalorder %s87, %s90
      %p96 = scmp.eq.s32.totalorder %s16, 0
      %p97 = por %p95, %p96
      %p98 = scmp.ne.s32.totalorder %s87, %s90
      %p99 = scmp.eq.s32.totalorder %s21, 1
      %p100 = por %p98, %p99
      %p101 = scmp.ne.s32.totalorder %s90, %s91
      %p102 = scmp.eq.s32.totalorder %s21, 0
      %p103 = por %p101, %p102
      %p104 = scmp.ne.s32.totalorder %s90, %s91
      %p105 = scmp.eq.s32.totalorder %s22, 1
      %p106 = por %p104, %p105
      %p108 = scmp.ne.s32.totalorder %s91, %s107
      %p109 = scmp.eq.s32.totalorder %s22, 0
      %p110 = por %p108, %p109
      %s111 = ssub.s32 %s24, %s31
      %s112 = ssub.s32 %s23, %s35
      %s113 = sor.u32 %s111, %s112
      %p114 = scmp.eq.s32.totalorder %s113, 0
      %s116 = sadd.s32 %s115, 1
      %s117 = scalar_select %p114, %s115, %s116
      %p120 = pneg %p114
      %p121 = scmp.eq.s32.totalorder %s16, 1
      %p122 = por %p120, %p121
      %p123 = scmp.ne.s32.totalorder %s115, %s118
      %p124 = scmp.eq.s32.totalorder %s16, 0
      %p125 = por %p123, %p124
      %p126 = scmp.ne.s32.totalorder %s115, %s118
      %p127 = scmp.eq.s32.totalorder %s21, 1
      %p128 = por %p126, %p127
      %p129 = scmp.ne.s32.totalorder %s118, %s119
      %p130 = scmp.eq.s32.totalorder %s21, 0
      %p131 = por %p129, %p130
      %p132 = scmp.ne.s32.totalorder %s118, %s119
      %p133 = scmp.eq.s32.totalorder %s22, 1
      %p134 = por %p132, %p133
      %p136 = scmp.ne.s32.totalorder %s119, %s135
      %p137 = scmp.eq.s32.totalorder %s22, 0
      %p138 = por %p136, %p137
      %p139 = scmp.le.s32.totalorder 1, %s16
      %p140 = scmp.lt.s32.totalorder %s16, 3
      %p141 = pnand %p139, %p140
      %p142 = pneg %p141
      // Predicated region
      $region9: #{tpu_custom_call.1} parent=5 // pred_check
        _
      $region10: #{tpu_custom_call.1} parent=5 // pred_check_branch
        %144 = sbr.rel (%p141) target = $region12
      $region11: #{tpu_custom_call.1} parent=5 // pred_region
        %s145 = ssub.s32 %s16, 1
        // Predicated region
        $region13: #{tpu_custom_call.1} parent=11 // pred_check
          %p146 = pneg %p49
        $region14: #{tpu_custom_call.1} parent=11 // pred_check_branch
          %148 = sbr.rel (%p146) target = $region16
        $region15: #{tpu_custom_call.1} parent=11 // pred_region
          _
        $region16: #{tpu_custom_call.1} parent=11 // pred_fallthru
          _
        // Predicated region
        $region17: #{tpu_custom_call.1} parent=11 // pred_check
          %p149 = pneg %p103
        $region18: #{tpu_custom_call.1} parent=11 // pred_check_branch
          %151 = sbr.rel (%p149) target = $region20
        $region19: #{tpu_custom_call.1} parent=11 // pred_region
          %p152 = scmp.lt.s32.totalorder %s25, 0
          %s153 = scalar_select %p152, %s25, 0
          %s154 = smul.addr %s153, 2
          %s155 = scalar_lea.vmem %s2, %s154
        $region20: #{tpu_custom_call.1} parent=11 // pred_fallthru
          _
      $region12: #{tpu_custom_call.1} parent=5 // pred_fallthru
        _
      %p156 = scmp.lt.s32.totalorder %s16, 2
      // Predicated region
      $region21: #{tpu_custom_call.1} parent=5 // pred_check
        %p157 = pneg %p156
      $region22: #{tpu_custom_call.1} parent=5 // pred_check_branch
        %159 = sbr.rel (%p157) target = $region24
      $region23: #{tpu_custom_call.1} parent=5 // pred_region
        // Predicated region
        $region25: #{tpu_custom_call.1} parent=23 // pred_check
          %p160 = pneg %p71
        $region26: #{tpu_custom_call.1} parent=23 // pred_check_branch
          %162 = sbr.rel (%p160) target = $region28
        $region27: #{tpu_custom_call.1} parent=23 // pred_region
          %s163 = sand.u32 %s61, 1
          %s164 = scalar_lea.sflag [#allocation4], %s163
          %s165 = sand.u32 %s61, 1
          %s166 = smul.addr %s165, 2
          %s167 = scalar_lea.vmem [#allocation3], %s166
          %s169 = ssub.s32 32, 32
          %170 = vsyncadd %s164, %s169
          %s171 = sadd.s32 %s23, %s24
          %s172 = smul.addr %s171, 32
          %s173 = scalar_lea.hbm %s1, %s172
          %s175 = sshll.u32 %s167, 4
          %s176 = int_to_ptr.vmem [resolvable:$true] %s175
          %178 = dma.hbm_to_vmem [thread:$0]  %s173, 32, %s176, %s164
        $region28: #{tpu_custom_call.1} parent=23 // pred_fallthru
          _
      $region24: #{tpu_custom_call.1} parent=5 // pred_fallthru
        _
      %p179 = scmp.le.s32.totalorder 1, %s16
      %p180 = scmp.lt.s32.totalorder %s16, 3
      %p181 = pnand %p179, %p180
      %p182 = pneg %p181
      // Predicated region
      $region29: #{tpu_custom_call.1} parent=5 // pred_check
        _
      $region30: #{tpu_custom_call.1} parent=5 // pred_check_branch
        %184 = sbr.rel (%p181) target = $region32
      $region31: #{tpu_custom_call.1} parent=5 // pred_region
        %s185 = ssub.s32 %s16, 1
        %s186 = sand.u32 %s64, 1
        %s187 = scalar_lea.sflag [#allocation4], %s186
        %s188 = sand.u32 %s64, 1
        %s189 = smul.addr %s188, 2
        %s190 = scalar_lea.vmem [#allocation3], %s189
        // Predicated region
        $region33: #{tpu_custom_call.1} parent=31 // pred_check
          %p191 = pneg %p77
        $region34: #{tpu_custom_call.1} parent=31 // pred_check_branch
          %193 = sbr.rel (%p191) target = $region36
        $region35: #{tpu_custom_call.1} parent=31 // pred_region
          %194 = dma.done %s187, 32
        $region36: #{tpu_custom_call.1} parent=31 // pred_fallthru
          _
        %p195 = pneg %p49
        %p196 = pneg %p46
        %s197 = sand.u32 %s64, 1
        %s198 = scalar_lea.sflag [#allocation4], %s197
        %s199 = sand.u32 %s64, 1
        %s200 = smul.addr %s199, 2
        %s201 = scalar_lea.vmem [#allocation3], %s200
        %p202 = pneg %p77
        %p203 = pneg %p74
        %p204 = scmp.lt.s32.totalorder %s25, 0
        %s205 = scalar_select %p204, %s25, 0
        %s206 = smul.addr %s205, 2
        %s207 = scalar_lea.vmem %s2, %s206
        %p208 = pneg %p103
        %p209 = pneg %p100
        %p210 = pneg %p131
        %p211 = pneg %p128
        %s212 = sand.u32 %s118, 1
        %s213 = scalar_lea.sflag [#allocation5], %s212
        %s214 = sand.u32 %s118, 1
        %s215 = smul.addr %s214, 2
        %s216 = scalar_lea.vmem [#allocation6], %s215
        %p217 = scmp.lt.s32.totalorder %s25, 0
        %s218 = scalar_select %p217, %s25, 0
        %s219 = smul.addr %s218, 2
        %s220 = scalar_lea.vmem %s2, %s219
        %v221 = vld [vmem:[%s190] sm:$0x3]
        %v222 = vld [vmem:[%s220] sm:$0x3]
        %v223 = vadd.f32 %v221, %v222
        %224 = vst [vmem:[%s216] sm:$0x3] %v223
        %s225 = sand.u32 %s118, 1
        %s226 = scalar_lea.sflag [#allocation5], %s225
        %s227 = sand.u32 %s118, 1
        %s228 = smul.addr %s227, 2
        %s229 = scalar_lea.vmem [#allocation6], %s228
        // Predicated region
        $region37: #{tpu_custom_call.1} parent=31 // pred_check
          %p230 = pneg %p128
        $region38: #{tpu_custom_call.1} parent=31 // pred_check_branch
          %232 = sbr.rel (%p230) target = $region40
        $region39: #{tpu_custom_call.1} parent=31 // pred_region
          %s234 = ssub.s32 32, 32
          %235 = vsyncadd %s226, %s234
          %s236 = sadd.s32 %s25, %s26
          %s237 = smul.addr %s236, 32
          %s238 = scalar_lea.hbm %s3, %s237
          %s240 = sshll.u32 %s229, 4
          %s241 = int_to_ptr.vmem [resolvable:$true] %s240
          %243 = dma.vmem_to_hbm [thread:$0]  %s241, 32, %s238, %s226
        $region40: #{tpu_custom_call.1} parent=31 // pred_fallthru
          _
      $region32: #{tpu_custom_call.1} parent=5 // pred_fallthru
        _
      %p244 = scmp.le.s32.totalorder 2, %s16
      // Predicated region
      $region41: #{tpu_custom_call.1} parent=5 // pred_check
        %p245 = pneg %p244
      $region42: #{tpu_custom_call.1} parent=5 // pred_check_branch
        %247 = sbr.rel (%p245) target = $region44
      $region43: #{tpu_custom_call.1} parent=5 // pred_region
        %s248 = ssub.s32 %s16, 2
        // Predicated region
        $region45: #{tpu_custom_call.1} parent=43 // pred_check
          %p249 = pneg %p134
        $region46: #{tpu_custom_call.1} parent=43 // pred_check_branch
          %251 = sbr.rel (%p249) target = $region48
        $region47: #{tpu_custom_call.1} parent=43 // pred_region
          %s252 = sand.u32 %s119, 1
          %s253 = scalar_lea.sflag [#allocation5], %s252
          %s254 = sand.u32 %s119, 1
          %s255 = smul.addr %s254, 2
          %s256 = scalar_lea.vmem [#allocation6], %s255
          %257 = dma.done %s253, 32
        $region48: #{tpu_custom_call.1} parent=43 // pred_fallthru
          _
      $region44: #{tpu_custom_call.1} parent=5 // pred_fallthru
        _
    $region6: #{tpu_custom_call.1} parent=1 // loop_footer
      %s20 = sadd.s32 1, %s16
    $region7: #{tpu_custom_call.1} parent=1 // loop_footer_branch
      %15 = sbr.rel target = $region3
    $region8: #{tpu_custom_call.1} parent=1 // loop_exit
      _
    %258 = vsyncpa [#allocation4], 1
    %s259 = scalar_lea.sflag [#allocation4], 1
    %260 = vsyncpa %s259, 1
    %261 = vsyncpa [#allocation5], 1
    %s262 = scalar_lea.sflag [#allocation5], 1
    %263 = vsyncpa %s262, 1

</llo_original>
